<compile_context>
chip_gen: v6e
topology: v6e:2x2x1
jax: 0.10.0
libtpu: 0.0.40
codegen_flags: <defaults>
</compile_context>

<pallas_src>
import functools

import jax
import jax.numpy as jnp
import numpy as np
from jax.experimental import pallas as pl
from jax.experimental.pallas import tpu as pltpu

BN_EPS = 1e-4  # matches nn.BatchNorm2d(eps=0.0001) in the module

_TM_HARD_CAP = 8192                       # lanes per spatial tile (sweepable)
_TILE_VMEM_BUDGET = 20 * 1024 * 1024      # tiles+weights budget, fits every generation


# ---------------------------------------------------------------------------
# Pallas kernel: fused 1x1 conv (BN scale pre-folded) + bias + SiLU, lane-dense
# ---------------------------------------------------------------------------

def _focus_conv_kernel(x_ref, w_ref, b_ref, o_ref):
    """x: (C4, TM) bf16, w: (C2, C4) bf16 (BN scale folded in), b: (C2, 1) f32,
    o: (C2, TM) out_dtype."""
    y = jnp.dot(w_ref[...], x_ref[...], preferred_element_type=jnp.float32)
    y = y + b_ref[...]                                  # folded BatchNorm (eval) bias
    # SiLU with a single EUP transcendental: sigmoid(y) = 0.5*tanh(0.5*y) + 0.5
    o_ref[...] = (y * (0.5 * jnp.tanh(0.5 * y) + 0.5)).astype(o_ref.dtype)


# ---------------------------------------------------------------------------
# Layout helpers
# ---------------------------------------------------------------------------

def _space_to_depth_patches(x_nchw, c1_pad):
    """(N, C1, H, W) -> (N, 4*c1_pad, Ho*Wo) patch matrix, PyTorch Focus channel order.

    Focus concatenates [x[::2,::2], x[1::2,::2], x[::2,1::2], x[1::2,1::2]]
    along channels, i.e. channel block index k = dx*2 + dy.
    """
    N, C, H, W = x_nchw.shape
    assert H % 2 == 0 and W % 2 == 0, "Focus requires even H and W"
    Ho, Wo = H // 2, W // 2
    if c1_pad > C:
        x_nchw = jnp.pad(x_nchw, ((0, 0), (0, c1_pad - C), (0, 0), (0, 0)))
        C = c1_pad
    x6 = x_nchw.reshape(N, C, Ho, 2, Wo, 2)       # axes: (n, c, i, dy, j, dx)
    xt = jnp.transpose(x6, (0, 5, 3, 1, 2, 4))    # -> (n, dx, dy, c, i, j)
    return xt.reshape(N, 4 * C, Ho * Wo)


def _pick_tile(howo, c4, c2, out_bytes):
    """Largest lane-dense spatial tile that fits the per-generation VMEM budget."""
    fixed = 2 * c2 * c4 * 2 + 2 * c2 * 4                 # resident weights (bf16) + bias
    per_col = 2 * (c4 * 2) + 2 * (c2 * out_bytes)        # double-buffered x + out tiles
    cap = max(128, min(_TM_HARD_CAP, (_TILE_VMEM_BUDGET - fixed) // per_col))
    if howo <= cap:
        return howo, howo                                # one full-width tile per image
    best = 0
    t = 128
    while t <= cap:                                      # largest 128-multiple dividing Ho*Wo
        if howo % t == 0:
            best = t
        t += 128
    if best:
        return best, howo                                # exact tiling, no padding
    tm = (cap // 128) * 128                              # ragged spatial size: pad once
    return tm, ((howo + tm - 1) // tm) * tm


# ---------------------------------------------------------------------------
# Wrapper
# ---------------------------------------------------------------------------

def focus_forward(params, x_nchw, out_dtype=jnp.float32):
    """Focus.forward: space-to-depth + Conv(4*C1 -> C2, k=1) + BN + SiLU, NCHW out."""
    N, C1, H, W = x_nchw.shape
    Ho, Wo = H // 2, W // 2
    HoWo = Ho * Wo
    C2 = params["w"].shape[0]

    # Pad c1 so that 4*c1 is a multiple of 16 (bf16 sublane pack / clean MXU K).
    C1p = ((C1 + 3) // 4) * 4
    C4 = 4 * C1p

    # Fold BN scale into the conv weight; only the bias add stays in the kernel.
    w = params["w"].reshape(C2, 4, C1)
    if C1p > C1:
        w = jnp.pad(w, ((0, 0), (0, 0), (0, C1p - C1)))
    w_eff = (w.reshape(C2, C4) * params["scale"]).astype(jnp.bfloat16)
    bias = params["bias"]                                              # (C2, 1) f32

    # Space-to-depth + channel concat + bf16 cast as ONE lane-dense XLA layout pass.
    # TODO(synk): fold this rearrangement into the kernel via strided make_async_copy
    #             per (dy,dx) parity to drop this remaining extra HBM pass.
    xt = _space_to_depth_patches(x_nchw.astype(jnp.bfloat16), C1p)     # (N, C4, HoWo)

    out_bytes = jnp.dtype(out_dtype).itemsize
    TM, howo_pad = _pick_tile(HoWo, C4, C2, out_bytes)
    if howo_pad != HoWo:
        # Only hit when no multiple-of-128 tile divides Ho*Wo (never at typical YOLO sizes).
        # TODO(synk): replace with a masked tail block to avoid this one-off pad copy.
        xt = jnp.pad(xt, ((0, 0), (0, 0), (0, howo_pad - HoWo)))
    n_tiles = howo_pad // TM

    out = pl.pallas_call(
        _focus_conv_kernel,
        out_shape=jax.ShapeDtypeStruct((N, C2, howo_pad), out_dtype),
        grid=(N, n_tiles),
        in_specs=[
            pl.BlockSpec((None, C4, TM), lambda n, j: (n, 0, j)),      # activations tile
            pl.BlockSpec((C2, C4), lambda n, j: (0, 0)),               # weight (resident)
            pl.BlockSpec((C2, 1), lambda n, j: (0, 0)),                # BN bias
        ],
        out_specs=pl.BlockSpec((None, C2, TM), lambda n, j: (n, 0, j)),  # NCHW direct
        compiler_params=pltpu.CompilerParams(
            dimension_semantics=("parallel", "parallel"),
            vmem_limit_bytes=32 * 1024 * 1024),
    )(xt, w_eff, bias)

    if howo_pad != HoWo:
        out = out[:, :, :HoWo]          # padded tail columns discarded
    return out.reshape(N, C2, Ho, Wo)   # free view: already batch/channel ordered (NCHW)


# ---------------------------------------------------------------------------
# Parameter construction (deterministic, BN folded into per-channel scale/bias)
# ---------------------------------------------------------------------------

def make_focus_params(key, c1, c2):
    kw, k1, k2, k3, k4 = jax.random.split(key, 5)
    w = 0.3 * jax.random.normal(kw, (c2, 4 * c1), jnp.float32)  # Conv2d(4c1,c2,1) weight
    gamma = 1.0 + 0.1 * jax.random.normal(k1, (c2,), jnp.float32)
    beta = 0.1 * jax.random.normal(k2, (c2,), jnp.float32)
    mean = 0.1 * jax.random.normal(k3, (c2,), jnp.float32)
    var = jnp.abs(jax.random.normal(k4, (c2,), jnp.float32)) + 0.5
    scale = gamma / jnp.sqrt(var + BN_EPS)
    bias = beta - mean * scale
    return {"w": w, "scale": scale.reshape(c2, 1), "bias": bias.reshape(c2, 1)}


# ---------------------------------------------------------------------------
# Pure-JAX reference (mirrors the PyTorch Focus.forward semantics exactly;
# the shape print() calls in the PyTorch forward are side-effect-only and skipped)
# ---------------------------------------------------------------------------

def focus_reference(params, x):
    cat = jnp.concatenate(
        [x[..., ::2, ::2], x[..., 1::2, ::2],
         x[..., ::2, 1::2], x[..., 1::2, 1::2]], axis=1)          # (N, 4*C1, Ho, Wo)
    y = jnp.einsum("nchw,oc->nohw", cat, params["w"])
    y = y * params["scale"].reshape(1, -1, 1, 1) + params["bias"].reshape(1, -1, 1, 1)
    return y * jax.nn.sigmoid(y)                                   # SiLU


# ---------------------------------------------------------------------------

if __name__ == "__main__":
    # small shapes consistent with the module: Focus(c1=4, c2=8), N=2, H=W=16
    N, C1, C2, H, W = 2, 4, 8, 16, 16
    x = jax.random.normal(jax.random.PRNGKey(0), (N, C1, H, W), jnp.float32)
    params = make_focus_params(jax.random.PRNGKey(1), C1, C2)

    out = jax.jit(functools.partial(focus_forward, params))(x)
    out = jax.block_until_ready(out)

    ref = jax.block_until_ready(focus_reference(params, x))
    assert out.shape == (N, C2, H // 2, W // 2), out.shape
    np.testing.assert_allclose(np.asarray(out), np.asarray(ref), rtol=3e-2, atol=3e-2)

    print("KERNEL_OK")
</pallas_src>

<mosaic_0001>
module attributes {stable_mosaic.version = 11 : i64} {
  func.func @_focus_conv_kernel(%arg0: i32, %arg1: i32, %arg2: memref<1x16x64xbf16, #tpu.memory_space<vmem>>, %arg3: memref<8x16xbf16, #tpu.memory_space<vmem>>, %arg4: memref<8x1xf32, #tpu.memory_space<vmem>>, %arg5: memref<1x8x64xf32, #tpu.memory_space<vmem>>) attributes {dimension_semantics = [#tpu.dimension_semantics<parallel>, #tpu.dimension_semantics<parallel>], iteration_bounds = array<i64: 2, 1>, scalar_prefetch = 0 : i64, scratch_operands = 0 : i64, tpu.core_type = #tpu.core_type<tc>, window_params = [{transform_indices = @transform_0, window_bounds = array<i64: 1, 16, 64>}, {pipeline_mode = #tpu.pipeline_mode<synchronous>, transform_indices = @transform_1, window_bounds = array<i64: 8, 16>}, {pipeline_mode = #tpu.pipeline_mode<synchronous>, transform_indices = @transform_2, window_bounds = array<i64: 8, 1>}, {transform_indices = @transform_3, window_bounds = array<i64: 1, 8, 64>}]} {
    %c0 = arith.constant 0 : index
    %c0_0 = arith.constant 0 : index
    %0 = vector.load %arg3[%c0, %c0_0] : memref<8x16xbf16, #tpu.memory_space<vmem>>, vector<8x16xbf16>
    %c0_1 = arith.constant 0 : index
    %c0_2 = arith.constant 0 : index
    %c0_3 = arith.constant 0 : index
    %1 = vector.load %arg2[%c0_1, %c0_2, %c0_3] : memref<1x16x64xbf16, #tpu.memory_space<vmem>>, vector<1x16x64xbf16>
    %2 = vector.shape_cast %1 : vector<1x16x64xbf16> to vector<16x64xbf16>
    %cst = arith.constant dense<0.000000e+00> : vector<8x64xf32>
    %3 = tpu.matmul %0, %2, %cst {dimension_numbers = #tpu.dot_dimension_numbers<[1], [0], [0], [1], [0, 0, 1, 1], [], []>} : vector<8x16xbf16>, vector<16x64xbf16>, vector<8x64xf32> -> vector<8x64xf32>
    %c0_4 = arith.constant 0 : index
    %c0_5 = arith.constant 0 : index
    %4 = vector.load %arg4[%c0_4, %c0_5] : memref<8x1xf32, #tpu.memory_space<vmem>>, vector<8x1xf32>
    %5 = vector.broadcast %4 : vector<8x1xf32> to vector<8x64xf32>
    %6 = arith.addf %3, %5 : vector<8x64xf32>
    %cst_6 = arith.constant 5.000000e-01 : f32
    %7 = vector.broadcast %cst_6 : f32 to vector<8x64xf32>
    %8 = arith.mulf %7, %6 : vector<8x64xf32>
    %9 = math.tanh %8 : vector<8x64xf32>
    %cst_7 = arith.constant 5.000000e-01 : f32
    %10 = vector.broadcast %cst_7 : f32 to vector<8x64xf32>
    %11 = arith.mulf %10, %9 : vector<8x64xf32>
    %cst_8 = arith.constant 5.000000e-01 : f32
    %12 = vector.broadcast %cst_8 : f32 to vector<8x64xf32>
    %13 = arith.addf %11, %12 : vector<8x64xf32>
    %14 = arith.mulf %6, %13 : vector<8x64xf32>
    %c0_9 = arith.constant 0 : index
    %c0_10 = arith.constant 0 : index
    %c0_11 = arith.constant 0 : index
    %15 = vector.load %arg5[%c0_9, %c0_10, %c0_11] : memref<1x8x64xf32, #tpu.memory_space<vmem>>, vector<1x8x64xf32>
    %16 = vector.shape_cast %15 : vector<1x8x64xf32> to vector<8x64xf32>
    %17 = vector.shape_cast %14 : vector<8x64xf32> to vector<1x8x64xf32>
    tpu.vector_store %arg5[%c0_9, %c0_10, %c0_11], %17 {strides = array<i32>} : memref<1x8x64xf32, #tpu.memory_space<vmem>>, vector<1x8x64xf32>,
    return
  }
  func.func @transform_0(%arg0: i32, %arg1: i32) -> (i32, i32, i32) {
    %c0_i32 = arith.constant 0 : i32
    %c0_i32_0 = arith.constant 0 : i32
    return %arg0, %c0_i32, %arg1 : i32, i32, i32
  }
  func.func @transform_1(%arg0: i32, %arg1: i32) -> (i32, i32) {
    %c0_i32 = arith.constant 0 : i32
    %c0_i32_0 = arith.constant 0 : i32
    %c0_i32_1 = arith.constant 0 : i32
    return %c0_i32, %c0_i32_0 : i32, i32
  }
  func.func @transform_2(%arg0: i32, %arg1: i32) -> (i32, i32) {
    %c0_i32 = arith.constant 0 : i32
    %c0_i32_0 = arith.constant 0 : i32
    %c0_i32_1 = arith.constant 0 : i32
    return %c0_i32, %c0_i32_0 : i32, i32
  }
  func.func @transform_3(%arg0: i32, %arg1: i32) -> (i32, i32, i32) {
    %c0_i32 = arith.constant 0 : i32
    %c0_i32_0 = arith.constant 0 : i32
    return %arg0, %c0_i32, %arg1 : i32, i32, i32
  }
}

</mosaic_0001>

<llo_original>
// kernel: focus_forward.1
$region0: #{focus_forward.1}
  #allocation0 [shape = 'u32[]', space=smem, size = 0x4, offset = 0x4, fixed_abs, tag = 'smem constant byte address 0x4 - core index']
  #allocation1 [shape = 'u32[144,128]{1,0:T(1,128)}', space=vmem, size = 0x12000, scoped, tag = 'internal scratch']
  %s0 = inlined_call_operand.vmem [shape: bf16[2,16,64], index: 0, kind: input, shape index: {}]
  %s1 = inlined_call_operand.vmem [shape: bf16[8,16], index: 1, kind: input, shape index: {}]
  %s2 = inlined_call_operand.vmem [shape: f32[8,1], index: 2, kind: input, shape index: {}]
  %s3 = inlined_call_operand.vmem [shape: f32[2,8,64], index: 3, kind: output, shape index: {}]
  %s4 = sld [smem:[#allocation0]]
  $region45: #{focus_forward.1} parent=0
    _
  %s6 = ssub.s32 1, %s4
  %s7 = scalar_select 0, %s6, %s4
  loop: start=0, step=1, limit=4
  $region2: #{focus_forward.1} parent=0 // loop_pre_header
    _
  $region3: #{focus_forward.1} parent=0 // loop_header
    %s9 = sphi 0, %s13
    %p10 = scmp.ge.s32.totalorder %s9, 4
    %s16 = sphi 0, %s28
    %s17 = sphi 0, %s24
    %s18 = sphi 0, %s16
    %s19 = sphi 0, %s17
    %s20 = sphi 0, %s18
    %s21 = sphi 0, %s19
    %s33 = sphi 0, %s35
    %s36 = sphi 0, %s33
    %s37 = sphi 0, %s36
    %s53 = sphi 0, %s37
    %s57 = sphi 0, %s57
    %s59 = sphi 0, %s57
    %s60 = sphi 0, %s59
    %s74 = sphi 0, %s60
    %s78 = sphi 0, %s78
    %s80 = sphi 0, %s78
    %s81 = sphi 0, %s80
    %s95 = sphi 0, %s81
    %s103 = sphi 0, %s105
    %s106 = sphi 0, %s103
    %s107 = sphi 0, %s106
    %s123 = sphi 0, %s107
  $region4: #{focus_forward.1} parent=0 // loop_header_branch
    %12 = sbr.rel (%p10) target = $region8
  $region5: #{focus_forward.1} parent=0 // loop_body
    %s14 = ssub.s32 %s9, 1
    %s15 = ssub.s32 %s9, 2
    %s22 = sadd.s32 1, %s17
    %p23 = scmp.ge.s32.totalorder %s22, 1
    %s24 = scalar_select %p23, 0, %s22
    %s25 = sadd.s32 1, %s16
    %s26 = scalar_select %p23, %s25, %s16
    %p27 = scmp.ge.s32.totalorder %s26, 2
    %s28 = scalar_select %p27, 0, %s26
    %s29 = ssub.s32 %s16, %s28
    %s30 = ssub.s32 %s17, %s24
    %s31 = sor.u32 %s29, %s30
    %p32 = scmp.eq.s32.totalorder %s31, 0
    %s34 = sadd.s32 %s33, 1
    %s35 = scalar_select %p32, %s33, %s34
    %p38 = pneg %p32
    %p39 = scmp.eq.s32.totalorder %s9, 1
    %p40 = por %p38, %p39
    %p41 = scmp.ne.s32.totalorder %s33, %s36
    %p42 = scmp.eq.s32.totalorder %s9, 0
    %p43 = por %p41, %p42
    %p44 = scmp.ne.s32.totalorder %s33, %s36
    %p45 = scmp.eq.s32.totalorder %s14, 1
    %p46 = por %p44, %p45
    %p47 = scmp.ne.s32.totalorder %s36, %s37
    %p48 = scmp.eq.s32.totalorder %s14, 0
    %p49 = por %p47, %p48
    %p50 = scmp.ne.s32.totalorder %s36, %s37
    %p51 = scmp.eq.s32.totalorder %s15, 1
    %p52 = por %p50, %p51
    %p54 = scmp.ne.s32.totalorder %s37, %s53
    %p55 = scmp.eq.s32.totalorder %s15, 0
    %p56 = por %p54, %p55
    %s58 = sadd.s32 %s57, 1
    %p61 = scmp.eq.s32.totalorder %s9, 1
    %p62 = scmp.ne.s32.totalorder %s57, %s59
    %p63 = scmp.eq.s32.totalorder %s9, 0
    %p64 = por %p62, %p63
    %p65 = scmp.ne.s32.totalorder %s57, %s59
    %p66 = scmp.eq.s32.totalorder %s14, 1
    %p67 = por %p65, %p66
    %p68 = scmp.ne.s32.totalorder %s59, %s60
    %p69 = scmp.eq.s32.totalorder %s14, 0
    %p70 = por %p68, %p69
    %p71 = scmp.ne.s32.totalorder %s59, %s60
    %p72 = scmp.eq.s32.totalorder %s15, 1
    %p73 = por %p71, %p72
    %p75 = scmp.ne.s32.totalorder %s60, %s74
    %p76 = scmp.eq.s32.totalorder %s15, 0
    %p77 = por %p75, %p76
    %s79 = sadd.s32 %s78, 1
    %p82 = scmp.eq.s32.totalorder %s9, 1
    %p83 = scmp.ne.s32.totalorder %s78, %s80
    %p84 = scmp.eq.s32.totalorder %s9, 0
    %p85 = por %p83, %p84
    %p86 = scmp.ne.s32.totalorder %s78, %s80
    %p87 = scmp.eq.s32.totalorder %s14, 1
    %p88 = por %p86, %p87
    %p89 = scmp.ne.s32.totalorder %s80, %s81
    %p90 = scmp.eq.s32.totalorder %s14, 0
    %p91 = por %p89, %p90
    %p92 = scmp.ne.s32.totalorder %s80, %s81
    %p93 = scmp.eq.s32.totalorder %s15, 1
    %p94 = por %p92, %p93
    %p96 = scmp.ne.s32.totalorder %s81, %s95
    %p97 = scmp.eq.s32.totalorder %s15, 0
    %p98 = por %p96, %p97
    %s99 = ssub.s32 %s16, %s28
    %s100 = ssub.s32 %s17, %s24
    %s101 = sor.u32 %s99, %s100
    %p102 = scmp.eq.s32.totalorder %s101, 0
    %s104 = sadd.s32 %s103, 1
    %s105 = scalar_select %p102, %s103, %s104
    %p108 = pneg %p102
    %p109 = scmp.eq.s32.totalorder %s9, 1
    %p110 = por %p108, %p109
    %p111 = scmp.ne.s32.totalorder %s103, %s106
    %p112 = scmp.eq.s32.totalorder %s9, 0
    %p113 = por %p111, %p112
    %p114 = scmp.ne.s32.totalorder %s103, %s106
    %p115 = scmp.eq.s32.totalorder %s14, 1
    %p116 = por %p114, %p115
    %p117 = scmp.ne.s32.totalorder %s106, %s107
    %p118 = scmp.eq.s32.totalorder %s14, 0
    %p119 = por %p117, %p118
    %p120 = scmp.ne.s32.totalorder %s106, %s107
    %p121 = scmp.eq.s32.totalorder %s15, 1
    %p122 = por %p120, %p121
    %p124 = scmp.ne.s32.totalorder %s107, %s123
    %p125 = scmp.eq.s32.totalorder %s15, 0
    %p126 = por %p124, %p125
    %p127 = scmp.le.s32.totalorder 1, %s9
    %p128 = scmp.lt.s32.totalorder %s9, 3
    %p129 = pnand %p127, %p128
    %p130 = pneg %p129
    // Predicated region
    $region9: #{focus_forward.1} parent=5 // pred_check
      _
    $region10: #{focus_forward.1} parent=5 // pred_check_branch
      %132 = sbr.rel (%p129) target = $region12
    $region11: #{focus_forward.1} parent=5 // pred_region
      %s133 = ssub.s32 %s9, 1
      // Predicated region
      $region13: #{focus_forward.1} parent=11 // pred_check
        %p134 = pneg %p70
      $region14: #{focus_forward.1} parent=11 // pred_check_branch
        %136 = sbr.rel (%p134) target = $region16
      $region15: #{focus_forward.1} parent=11 // pred_region
        _
      $region16: #{focus_forward.1} parent=11 // pred_fallthru
        _
      // Predicated region
      $region17: #{focus_forward.1} parent=11 // pred_check
        %p137 = pneg %p91
      $region18: #{focus_forward.1} parent=11 // pred_check_branch
        %139 = sbr.rel (%p137) target = $region20
      $region19: #{focus_forward.1} parent=11 // pred_region
        _
      $region20: #{focus_forward.1} parent=11 // pred_fallthru
        _
    $region12: #{focus_forward.1} parent=5 // pred_fallthru
      _
    %p140 = scmp.lt.s32.totalorder %s9, 2
    // Predicated region
    $region21: #{focus_forward.1} parent=5 // pred_check
      %p141 = pneg %p140
    $region22: #{focus_forward.1} parent=5 // pred_check_branch
      %143 = sbr.rel (%p141) target = $region24
    $region23: #{focus_forward.1} parent=5 // pred_region
      // Predicated region
      $region25: #{focus_forward.1} parent=23 // pred_check
        %p144 = pneg %p43
      $region26: #{focus_forward.1} parent=23 // pred_check_branch
        %146 = sbr.rel (%p144) target = $region28
      $region27: #{focus_forward.1} parent=23 // pred_region
        %p147 = scmp.lt.s32.totalorder %s16, 1
        %s148 = scalar_select %p147, %s16, 1
        %p149 = scmp.lt.s32.totalorder %s17, 0
        %s150 = scalar_select %p149, %s17, 0
        %s151 = smul.addr %s148, 2
        %s152 = sadd.s32 %s150, %s151
        %s153 = smul.addr %s152, 4
        %s154 = scalar_lea.vmem %s0, %s153
      $region28: #{focus_forward.1} parent=23 // pred_fallthru
        _
    $region24: #{focus_forward.1} parent=5 // pred_fallthru
      _
    %p155 = scmp.le.s32.totalorder 1, %s9
    %p156 = scmp.lt.s32.totalorder %s9, 3
    %p157 = pnand %p155, %p156
    %p158 = pneg %p157
    // Predicated region
    $region29: #{focus_forward.1} parent=5 // pred_check
      _
    $region30: #{focus_forward.1} parent=5 // pred_check_branch
      %160 = sbr.rel (%p157) target = $region32
    $region31: #{focus_forward.1} parent=5 // pred_region
      %s161 = ssub.s32 %s9, 1
      %p162 = scmp.lt.s32.totalorder %s18, 1
      %s163 = scalar_select %p162, %s18, 1
      %p164 = scmp.lt.s32.totalorder %s19, 0
      %s165 = scalar_select %p164, %s19, 0
      %s166 = smul.addr %s163, 2
      %s167 = sadd.s32 %s165, %s166
      %s168 = smul.addr %s167, 4
      %s169 = scalar_lea.vmem %s0, %s168
      %p170 = pneg %p49
      %p171 = pneg %p46
      %p172 = pneg %p70
      %p173 = pneg %p67
      %p174 = pneg %p91
      %p175 = pneg %p88
      %p176 = pneg %p119
      %p177 = pneg %p116
      %p178 = scmp.lt.s32.totalorder %s18, 1
      %s179 = scalar_select %p178, %s18, 1
      %p180 = scmp.lt.s32.totalorder %s19, 0
      %s181 = scalar_select %p180, %s19, 0
      %s182 = sadd.s32 %s181, %s179
      %s183 = smul.addr %s182, 8
      %s184 = scalar_lea.vmem %s3, %s183
      %p185 = scmp.lt.s32.totalorder %s18, 1
      %s186 = scalar_select %p185, %s18, 1
      %p187 = scmp.lt.s32.totalorder %s19, 0
      %s188 = scalar_select %p187, %s19, 0
      %s189 = smul.addr %s186, 2
      %s190 = sadd.s32 %s188, %s189
      %s191 = smul.addr %s190, 4
      %s192 = scalar_lea.vmem %s0, %s191
      %p193 = scmp.lt.s32.totalorder %s18, 1
      %s194 = scalar_select %p193, %s18, 1
      %p195 = scmp.lt.s32.totalorder %s19, 0
      %s196 = scalar_select %p195, %s19, 0
      %s197 = sadd.s32 %s196, %s194
      %s198 = smul.addr %s197, 8
      %s199 = scalar_lea.vmem %s3, %s198
      %v201 = vld [vmem:[%s1] sm:$0xf]
      %v202 = vld [vmem:[%s192] sm:$0xf]
      %v203 = vld [vmem:[%s192 + $0x4] sm:$0xf]
      %v204 = vld [vmem:[%s2] sm:$0xff]
      %206 = vset.pattern.permute.xlu0 0
      %207 = vperm.xlu0 %206, %v204
      %v208 = vpop.permute.xlu0 %207
      %v212 = vunpack.c.l.b16 %v202
      %v213 = vunpack.c.l.b16 %v203
      %v214 = vpack.c.b16 %v213, %v212
      %vm216 = vcmask 130048
      %v218 = vsel %vm216, %v201, 0
      %220 = vmatprep.subr.bf16.mxu0 0
      %221 = vmatpush1.bf16.msra.mxu0 0
      %222 = vmatprep.subr.bf16.mxu0 0
      %223 = vmatpush1.bf16.msra.mxu0 0
      %224 = vmatprep.subr.bf16.mxu0 0
      %225 = vmatpush1.bf16.msra.mxu0 0
      %226 = vmatprep.subr.bf16.mxu0 0
      %227 = vmatpush1.bf16.msra.mxu0 0
      %228 = vmatprep.subr.bf16.mxu0 0
      %229 = vmatpush1.bf16.msra.mxu0 0
      %230 = vmatprep.subr.bf16.mxu0 0
      %231 = vmatpush1.bf16.msra.mxu0 0
      %232 = vmatprep.subr.bf16.mxu0 0
      %233 = vmatpush1.bf16.msra.mxu0 0
      %234 = vmatprep.subr.bf16.mxu0 0
      %235 = vmatpush1.bf16.msra.mxu0 %v214
      %236 = vmatprep.subr.bf16.mxu0 0
      %237 = vmatpush2.bf16.msra.mxu0 0
      %238 = vmatprep.subr.bf16.mxu0 0
      %239 = vmatpush2.bf16.msra.mxu0 0
      %240 = vmatprep.subr.bf16.mxu0 0
      %241 = vmatpush2.bf16.msra.mxu0 0
      %242 = vmatprep.subr.bf16.mxu0 0
      %243 = vmatpush2.bf16.msra.mxu0 0
      %244 = vmatprep.subr.bf16.mxu0 0
      %245 = vmatpush2.bf16.msra.mxu0 0
      %246 = vmatprep.subr.bf16.mxu0 0
      %247 = vmatpush2.bf16.msra.mxu0 0
      %248 = vmatprep.subr.bf16.mxu0 0
      %249 = vmatpush2.bf16.msra.mxu0 0
      %250 = vmatprep.subr.bf16.mxu0 0
      %251 = vmatpush2.bf16.msra.mxu0 0
      %252 = vmatprep.mubr.bf16.mxu0 0
      %253 = vmatmul.mubr.bf16.gmra.mxu0 %v218
      %v254 = vpop.f32.mrf.mxu0
      %v255 = vadd.f32 %v208, %v254
      %v256 = vpop.f32.mrf.mxu0
      %v257 = vpop.f32.mrf.mxu0
      %v258 = vpop.f32.mrf.mxu0
      %259 = vdwg.mxu0
      %v260 = vmul.f32 %v255, 0.5
      %v261 = vtanh.pop %v260
      %v262 = vmul.f32 %v261, 0.5
      %v263 = vadd.f32 %v262, 0.5
      %v264 = vmul.f32 %v255, %v263
      %vm265 = vcmask 523264
      %266 = vst.msk [vmem:[%s199] sm:$0xff] %vm265, %v264
      %p267 = scmp.lt.s32.totalorder %s18, 1
      %s268 = scalar_select %p267, %s18, 1
      %p269 = scmp.lt.s32.totalorder %s19, 0
      %s270 = scalar_select %p269, %s19, 0
      %s271 = sadd.s32 %s270, %s268
      %s272 = smul.addr %s271, 8
      %s273 = scalar_lea.vmem %s3, %s272
      // Predicated region
      $region33: #{focus_forward.1} parent=31 // pred_check
        %p274 = pneg %p116
      $region34: #{focus_forward.1} parent=31 // pred_check_branch
        %276 = sbr.rel (%p274) target = $region36
      $region35: #{focus_forward.1} parent=31 // pred_region
        _
      $region36: #{focus_forward.1} parent=31 // pred_fallthru
        _
    $region32: #{focus_forward.1} parent=5 // pred_fallthru
      _
    %p277 = scmp.le.s32.totalorder 2, %s9
    // Predicated region
    $region37: #{focus_forward.1} parent=5 // pred_check
      %p278 = pneg %p277
    $region38: #{focus_forward.1} parent=5 // pred_check_branch
      %280 = sbr.rel (%p278) target = $region40
    $region39: #{focus_forward.1} parent=5 // pred_region
      %s281 = ssub.s32 %s9, 2
      // Predicated region
      $region41: #{focus_forward.1} parent=39 // pred_check
        %p282 = pneg %p122
      $region42: #{focus_forward.1} parent=39 // pred_check_branch
        %284 = sbr.rel (%p282) target = $region44
      $region43: #{focus_forward.1} parent=39 // pred_region
        %p285 = scmp.lt.s32.totalorder %s20, 1
        %s286 = scalar_select %p285, %s20, 1
        %p287 = scmp.lt.s32.totalorder %s21, 0
        %s288 = scalar_select %p287, %s21, 0
        %s289 = sadd.s32 %s288, %s286
        %s290 = smul.addr %s289, 8
        %s291 = scalar_lea.vmem %s3, %s290
      $region44: #{focus_forward.1} parent=39 // pred_fallthru
        _
    $region40: #{focus_forward.1} parent=5 // pred_fallthru
      _
  $region6: #{focus_forward.1} parent=0 // loop_footer
    %s13 = sadd.s32 1, %s9
  $region7: #{focus_forward.1} parent=0 // loop_footer_branch
    %8 = sbr.rel target = $region3
  $region8: #{focus_forward.1} parent=0 // loop_exit
    _

</llo_original>
